<compile_context>
chip_gen: v6e
topology: v6e:2x2x1
jax: 0.10.0
libtpu: 0.0.40
codegen_flags: <defaults>
</compile_context>

<pallas_src>
import jax
import jax.numpy as jnp
from jax.experimental import pallas as pl
from jax.experimental.pallas import tpu as pltpu


def cppnet_bb_kernel(
    x_ref,             # (N, C*H*W) f32     flattened image batch
    wb_ref, bb_ref,    # backbone linear:   (C*H*W, input_dim) bf16, (1, input_dim) f32
    w1_ref,            # pre_feature[0]:    (input_dim, hidden) bf16   (bias dropped: BN cancels it)
    g_ref, be_ref,     # BatchNorm1d:       gamma (1, hidden) f32, beta (1, hidden) f32
    w2_ref, b2_ref,    # pre_feature[3]:    (hidden, hidden) bf16, (1, hidden) f32
    wh_ref, bh_ref,    # fused heads:       (hidden, 2*z_dim) bf16, (1, 2*z_dim) f32
    out_ref,           # out: (N, 2*z_dim)  = [ normalize(Z) | normalize(logits) ]
):
    f32 = jnp.float32
    bf16 = jnp.bfloat16

    # --- backbone (torch.no_grad forward): Linear + ReLU, bf16 into the MXU --
    x = x_ref[...].astype(bf16)
    feat = jnp.dot(x, wb_ref[...], preferred_element_type=f32)
    feat = jnp.maximum(feat + bb_ref[...], 0.0)

    # --- pre_feature: Linear -> BatchNorm1d -> ReLU -> Linear -> ReLU --------
    # b1 omitted: exactly cancelled by the training-mode BN mean subtraction.
    h = jnp.dot(feat.astype(bf16), w1_ref[...], preferred_element_type=f32)

    hidden = h.shape[1]
    # One-pass BN stats with a SINGLE cross-sublane reduce:
    # reduce concat([h, h*h]) (2*hidden lanes) over the batch axis, then split.
    stats = jnp.mean(jnp.concatenate([h, h * h], axis=1), axis=0, keepdims=True)
    mean = stats[:, :hidden]
    mean_sq = stats[:, hidden:]
    var = jnp.maximum(mean_sq - mean * mean, 0.0)   # clamp for numerical safety
    # Fold the BN affine into the normalization (2 elementwise passes).
    scale = g_ref[...] * jax.lax.rsqrt(var + 1e-5)
    shift = be_ref[...] - mean * scale
    h = jnp.maximum(h * scale + shift, 0.0)

    h = jnp.dot(h.astype(bf16), w2_ref[...], preferred_element_type=f32) + b2_ref[...]
    h = jnp.maximum(h, 0.0)

    # --- fused heads: one matmul for [subspace | cluster] ---------------------
    heads = jnp.dot(h.astype(bf16), wh_ref[...], preferred_element_type=f32) + bh_ref[...]

    # --- F.normalize(_, p=2, dim=1, eps=1e-12) without lane slices ------------
    # v / max(||v||, eps) == v * rsqrt(max(sum(v^2), eps^2)); the per-head sums
    # are computed with a column mask so `heads` never gets sliced/re-concat'd.
    z_dim = out_ref.shape[1] // 2
    col = jax.lax.broadcasted_iota(jnp.int32, heads.shape, 1)
    is_z = col < z_dim
    h2 = heads * heads
    z_ss = jnp.sum(jnp.where(is_z, h2, 0.0), axis=1, keepdims=True)
    l_ss = jnp.sum(jnp.where(is_z, 0.0, h2), axis=1, keepdims=True)
    inv_z = jax.lax.rsqrt(jnp.maximum(z_ss, 1e-24))
    inv_l = jax.lax.rsqrt(jnp.maximum(l_ss, 1e-24))
    col_scale = jnp.where(is_z, inv_z, inv_l)       # (N, 2*z_dim) via broadcast

    # Single unsliced output slab store.
    out_ref[...] = heads * col_scale


def prepare_params(params):
    """One-time parameter preparation: fuse the two heads and pre-cast the
    weight matrices to bf16 (biases / BN affine stay f32)."""
    bf16 = jnp.bfloat16
    w_head = jnp.concatenate([params["ws"], params["wc"]], axis=1)   # (hidden, 2*z)
    b_head = jnp.concatenate([params["bs"], params["bc"]], axis=1)   # (1, 2*z)
    return {
        "wb": params["wb"].astype(bf16), "bb": params["bb"],
        "w1": params["w1"].astype(bf16),
        "bn_gamma": params["bn_gamma"], "bn_beta": params["bn_beta"],
        "w2": params["w2"].astype(bf16), "b2": params["b2"],
        "w_head": w_head.astype(bf16), "b_head": b_head,
    }


def cppnet_bb_forward(x_nchw, prep):
    """x_nchw: (N, C, H, W) float32.  prep: output of prepare_params().
    Returns (Z, logits), each (N, z_dim)."""
    n = x_nchw.shape[0]
    x_flat = x_nchw.reshape(n, -1)       # row-major flatten == torch .view(N, -1)
    chw = x_flat.shape[1]
    input_dim = prep["wb"].shape[1]
    hidden = prep["w1"].shape[1]
    two_z = prep["w_head"].shape[1]
    z_dim = two_z // 2

    args = (
        x_flat,
        prep["wb"], prep["bb"],
        prep["w1"],
        prep["bn_gamma"], prep["bn_beta"],
        prep["w2"], prep["b2"],
        prep["w_head"], prep["b_head"],
    )

    # Advisory cost hint for XLA scheduling around this custom call.
    flops = 2 * n * (chw * input_dim + input_dim * hidden
                     + hidden * hidden + hidden * two_z)
    bytes_accessed = sum(int(a.size) * a.dtype.itemsize for a in args) \
        + n * two_z * 4
    cost = pl.CostEstimate(
        flops=int(flops),
        transcendentals=int(hidden + 2 * n),   # BN rsqrt + per-row normalize rsqrt
        bytes_accessed=int(bytes_accessed),
    )

    # Batch is small: every operand fits comfortably in VMEM, so use
    # whole-array blocks (no grid) and do the entire fused forward in one body.
    vmem_spec = pl.BlockSpec(memory_space=pltpu.MemorySpace.VMEM)
    out = pl.pallas_call(
        cppnet_bb_kernel,
        out_shape=jax.ShapeDtypeStruct((n, two_z), jnp.float32),
        in_specs=[vmem_spec] * len(args),
        out_specs=vmem_spec,
        cost_estimate=cost,
    )(*args)

    return out[:, :z_dim], out[:, z_dim:]


def cppnet_bb_reference(x_nchw, params):
    """Pure-JAX reference mirroring torch semantics (bf16 MXU feed, f32
    elementwise, b1 included, centered two-pass variance)."""
    f32, bf16 = jnp.float32, jnp.bfloat16
    n = x_nchw.shape[0]
    x = x_nchw.reshape(n, -1)

    def bdot(a, b):
        return jnp.dot(a.astype(bf16), b.astype(bf16), preferred_element_type=f32)

    feat = jnp.maximum(bdot(x, params["wb"]) + params["bb"], 0.0)
    h = bdot(feat, params["w1"]) + params["b1"]
    mean = jnp.mean(h, axis=0, keepdims=True)
    var = jnp.mean((h - mean) ** 2, axis=0, keepdims=True)
    h = (h - mean) / jnp.sqrt(var + 1e-5) * params["bn_gamma"] + params["bn_beta"]
    h = jnp.maximum(h, 0.0)
    h = jnp.maximum(bdot(h, params["w2"]) + params["b2"], 0.0)
    z = bdot(h, params["ws"]) + params["bs"]
    logits = bdot(h, params["wc"]) + params["bc"]
    z = z / jnp.maximum(jnp.linalg.norm(z, axis=1, keepdims=True), 1e-12)
    logits = logits / jnp.maximum(jnp.linalg.norm(logits, axis=1, keepdims=True), 1e-12)
    return z, logits


def init_params(key, in_features, input_dim, hidden_dim, z_dim):
    """Deterministic synthetic parameters (torch-Linear-style uniform init)."""
    def linear(key, fan_in, fan_out):
        kw, kb = jax.random.split(key)
        bound = 1.0 / jnp.sqrt(fan_in)
        w = jax.random.uniform(kw, (fan_in, fan_out), jnp.float32, -bound, bound)
        b = jax.random.uniform(kb, (1, fan_out), jnp.float32, -bound, bound)
        return w, b

    k = jax.random.split(key, 5)
    wb, bb = linear(k[0], in_features, input_dim)     # backbone projection
    w1, b1 = linear(k[1], input_dim, hidden_dim)      # pre_feature Linear 1
    w2, b2 = linear(k[2], hidden_dim, hidden_dim)     # pre_feature Linear 2
    ws, bs = linear(k[3], hidden_dim, z_dim)          # subspace head
    wc, bc = linear(k[4], hidden_dim, z_dim)          # cluster head
    return {
        "wb": wb, "bb": bb,
        "w1": w1, "b1": b1,
        "bn_gamma": jnp.ones((1, hidden_dim), jnp.float32),
        "bn_beta": jnp.zeros((1, hidden_dim), jnp.float32),
        "w2": w2, "b2": b2,
        "ws": ws, "bs": bs,
        "wc": wc, "bc": bc,
    }


if __name__ == "__main__":
    # Small shapes consistent with the module's forward (batch>1 for BatchNorm).
    N, C, H, W = 8, 4, 16, 16
    input_dim, hidden_dim, z_dim = 32, 64, 16

    key = jax.random.PRNGKey(0)
    kx, kp = jax.random.split(key)
    x = jax.random.normal(kx, (N, C, H, W), jnp.float32)

    params = init_params(kp, C * H * W, input_dim, hidden_dim, z_dim)
    prep = prepare_params(params)        # one-time: head fusion + bf16 weights

    Z, logits = cppnet_bb_forward(x, prep)
    jax.block_until_ready((Z, logits))

    # sanity: shapes, unit norms along dim=1, and agreement with a JAX reference
    assert Z.shape == (N, z_dim) and logits.shape == (N, z_dim)
    assert jnp.allclose(jnp.linalg.norm(Z, axis=1), 1.0, atol=1e-4)
    assert jnp.allclose(jnp.linalg.norm(logits, axis=1), 1.0, atol=1e-4)

    Z_ref, logits_ref = cppnet_bb_reference(x, params)
    assert jnp.max(jnp.abs(Z - Z_ref)) < 5e-2
    assert jnp.max(jnp.abs(logits - logits_ref)) < 5e-2

    print("KERNEL_OK")
</pallas_src>

<mosaic_0001>
module attributes {stable_mosaic.version = 11 : i64} {
  func.func @cppnet_bb_kernel(%arg0: memref<8x1024xf32, #tpu.memory_space<vmem>>, %arg1: memref<1024x32xbf16, #tpu.memory_space<vmem>>, %arg2: memref<1x32xf32, #tpu.memory_space<vmem>>, %arg3: memref<32x64xbf16, #tpu.memory_space<vmem>>, %arg4: memref<1x64xf32, #tpu.memory_space<vmem>>, %arg5: memref<1x64xf32, #tpu.memory_space<vmem>>, %arg6: memref<64x64xbf16, #tpu.memory_space<vmem>>, %arg7: memref<1x64xf32, #tpu.memory_space<vmem>>, %arg8: memref<64x32xbf16, #tpu.memory_space<vmem>>, %arg9: memref<1x32xf32, #tpu.memory_space<vmem>>, %arg10: memref<8x32xf32, #tpu.memory_space<vmem>>) attributes {dimension_semantics = [], scalar_prefetch = 0 : i64, scratch_operands = 0 : i64, tpu.core_type = #tpu.core_type<tc>} {
    %c0 = arith.constant 0 : index
    %c0_0 = arith.constant 0 : index
    %0 = vector.load %arg0[%c0, %c0_0] : memref<8x1024xf32, #tpu.memory_space<vmem>>, vector<8x1024xf32>
    %1 = arith.truncf %0 : vector<8x1024xf32> to vector<8x1024xbf16>
    %c0_1 = arith.constant 0 : index
    %c0_2 = arith.constant 0 : index
    %2 = vector.load %arg1[%c0_1, %c0_2] : memref<1024x32xbf16, #tpu.memory_space<vmem>>, vector<1024x32xbf16>
    %cst = arith.constant dense<0.000000e+00> : vector<8x32xf32>
    %3 = tpu.matmul %1, %2, %cst {dimension_numbers = #tpu.dot_dimension_numbers<[1], [0], [0], [1], [0, 0, 1, 1], [], []>} : vector<8x1024xbf16>, vector<1024x32xbf16>, vector<8x32xf32> -> vector<8x32xf32>
    %c0_3 = arith.constant 0 : index
    %c0_4 = arith.constant 0 : index
    %4 = vector.load %arg2[%c0_3, %c0_4] : memref<1x32xf32, #tpu.memory_space<vmem>>, vector<1x32xf32>
    %5 = vector.broadcast %4 : vector<1x32xf32> to vector<8x32xf32>
    %6 = arith.addf %3, %5 : vector<8x32xf32>
    %cst_5 = arith.constant 0.000000e+00 : f32
    %7 = vector.broadcast %cst_5 : f32 to vector<8x32xf32>
    %8 = arith.maximumf %6, %7 : vector<8x32xf32>
    %9 = arith.truncf %8 : vector<8x32xf32> to vector<8x32xbf16>
    %c0_6 = arith.constant 0 : index
    %c0_7 = arith.constant 0 : index
    %10 = vector.load %arg3[%c0_6, %c0_7] : memref<32x64xbf16, #tpu.memory_space<vmem>>, vector<32x64xbf16>
    %cst_8 = arith.constant dense<0.000000e+00> : vector<8x64xf32>
    %11 = tpu.matmul %9, %10, %cst_8 {dimension_numbers = #tpu.dot_dimension_numbers<[1], [0], [0], [1], [0, 0, 1, 1], [], []>} : vector<8x32xbf16>, vector<32x64xbf16>, vector<8x64xf32> -> vector<8x64xf32>
    %12 = arith.mulf %11, %11 : vector<8x64xf32>
    %13 = tpu.concatenate %11, %12 in 1 : vector<8x64xf32>, vector<8x64xf32> -> vector<8x128xf32>
    %cst_9 = arith.constant dense<0.000000e+00> : vector<128xf32>
    %14 = vector.multi_reduction <add>, %13, %cst_9 [0] : vector<8x128xf32> to vector<128xf32>
    %15 = vector.shape_cast %14 : vector<128xf32> to vector<1x128xf32>
    %cst_10 = arith.constant 8.000000e+00 : f32
    %16 = vector.broadcast %cst_10 : f32 to vector<1x128xf32>
    %17 = arith.divf %15, %16 : vector<1x128xf32>
    %18 = vector.extract_strided_slice %17 {offsets = [0, 0], sizes = [1, 64], strides = [1, 1]} : vector<1x128xf32> to vector<1x64xf32>
    %19 = vector.extract_strided_slice %17 {offsets = [0, 64], sizes = [1, 64], strides = [1, 1]} : vector<1x128xf32> to vector<1x64xf32>
    %20 = arith.mulf %18, %18 : vector<1x64xf32>
    %21 = arith.subf %19, %20 : vector<1x64xf32>
    %cst_11 = arith.constant 0.000000e+00 : f32
    %22 = vector.broadcast %cst_11 : f32 to vector<1x64xf32>
    %23 = arith.maximumf %21, %22 : vector<1x64xf32>
    %c0_12 = arith.constant 0 : index
    %c0_13 = arith.constant 0 : index
    %24 = vector.load %arg4[%c0_12, %c0_13] : memref<1x64xf32, #tpu.memory_space<vmem>>, vector<1x64xf32>
    %cst_14 = arith.constant 9.99999974E-6 : f32
    %25 = vector.broadcast %cst_14 : f32 to vector<1x64xf32>
    %26 = arith.addf %23, %25 : vector<1x64xf32>
    %27 = math.rsqrt %26 : vector<1x64xf32>
    %28 = arith.mulf %24, %27 : vector<1x64xf32>
    %c0_15 = arith.constant 0 : index
    %c0_16 = arith.constant 0 : index
    %29 = vector.load %arg5[%c0_15, %c0_16] : memref<1x64xf32, #tpu.memory_space<vmem>>, vector<1x64xf32>
    %30 = arith.mulf %18, %28 : vector<1x64xf32>
    %31 = arith.subf %29, %30 : vector<1x64xf32>
    %32 = vector.broadcast %28 : vector<1x64xf32> to vector<8x64xf32>
    %33 = arith.mulf %11, %32 : vector<8x64xf32>
    %34 = vector.broadcast %31 : vector<1x64xf32> to vector<8x64xf32>
    %35 = arith.addf %33, %34 : vector<8x64xf32>
    %cst_17 = arith.constant 0.000000e+00 : f32
    %36 = vector.broadcast %cst_17 : f32 to vector<8x64xf32>
    %37 = arith.maximumf %35, %36 : vector<8x64xf32>
    %38 = arith.truncf %37 : vector<8x64xf32> to vector<8x64xbf16>
    %c0_18 = arith.constant 0 : index
    %c0_19 = arith.constant 0 : index
    %39 = vector.load %arg6[%c0_18, %c0_19] : memref<64x64xbf16, #tpu.memory_space<vmem>>, vector<64x64xbf16>
    %cst_20 = arith.constant dense<0.000000e+00> : vector<8x64xf32>
    %40 = tpu.matmul %38, %39, %cst_20 {dimension_numbers = #tpu.dot_dimension_numbers<[1], [0], [0], [1], [0, 0, 1, 1], [], []>} : vector<8x64xbf16>, vector<64x64xbf16>, vector<8x64xf32> -> vector<8x64xf32>
    %c0_21 = arith.constant 0 : index
    %c0_22 = arith.constant 0 : index
    %41 = vector.load %arg7[%c0_21, %c0_22] : memref<1x64xf32, #tpu.memory_space<vmem>>, vector<1x64xf32>
    %42 = vector.broadcast %41 : vector<1x64xf32> to vector<8x64xf32>
    %43 = arith.addf %40, %42 : vector<8x64xf32>
    %cst_23 = arith.constant 0.000000e+00 : f32
    %44 = vector.broadcast %cst_23 : f32 to vector<8x64xf32>
    %45 = arith.maximumf %43, %44 : vector<8x64xf32>
    %46 = arith.truncf %45 : vector<8x64xf32> to vector<8x64xbf16>
    %c0_24 = arith.constant 0 : index
    %c0_25 = arith.constant 0 : index
    %47 = vector.load %arg8[%c0_24, %c0_25] : memref<64x32xbf16, #tpu.memory_space<vmem>>, vector<64x32xbf16>
    %cst_26 = arith.constant dense<0.000000e+00> : vector<8x32xf32>
    %48 = tpu.matmul %46, %47, %cst_26 {dimension_numbers = #tpu.dot_dimension_numbers<[1], [0], [0], [1], [0, 0, 1, 1], [], []>} : vector<8x64xbf16>, vector<64x32xbf16>, vector<8x32xf32> -> vector<8x32xf32>
    %c0_27 = arith.constant 0 : index
    %c0_28 = arith.constant 0 : index
    %49 = vector.load %arg9[%c0_27, %c0_28] : memref<1x32xf32, #tpu.memory_space<vmem>>, vector<1x32xf32>
    %50 = vector.broadcast %49 : vector<1x32xf32> to vector<8x32xf32>
    %51 = arith.addf %48, %50 : vector<8x32xf32>
    %52 = tpu.iota {dimensions = array<i32: 1>} : vector<8x32xi32>
    %c16_i32 = arith.constant 16 : i32
    %53 = vector.broadcast %c16_i32 : i32 to vector<8x32xi32>
    %54 = arith.cmpi slt, %52, %53 : vector<8x32xi32>
    %55 = arith.mulf %51, %51 : vector<8x32xf32>
    %cst_29 = arith.constant 0.000000e+00 : f32
    %56 = vector.broadcast %cst_29 : f32 to vector<8x32xf32>
    %57 = arith.select %54, %55, %56 : vector<8x32xi1>, vector<8x32xf32>
    %cst_30 = arith.constant dense<0.000000e+00> : vector<8xf32>
    %58 = vector.multi_reduction <add>, %57, %cst_30 [1] : vector<8x32xf32> to vector<8xf32>
    %59 = vector.shape_cast %58 : vector<8xf32> to vector<8x1xf32>
    %cst_31 = arith.constant 0.000000e+00 : f32
    %60 = vector.broadcast %cst_31 : f32 to vector<8x32xf32>
    %61 = arith.select %54, %60, %55 : vector<8x32xi1>, vector<8x32xf32>
    %cst_32 = arith.constant dense<0.000000e+00> : vector<8xf32>
    %62 = vector.multi_reduction <add>, %61, %cst_32 [1] : vector<8x32xf32> to vector<8xf32>
    %63 = vector.shape_cast %62 : vector<8xf32> to vector<8x1xf32>
    %cst_33 = arith.constant 1.000000e-24 : f32
    %64 = vector.broadcast %cst_33 : f32 to vector<8x1xf32>
    %65 = arith.maximumf %59, %64 : vector<8x1xf32>
    %66 = math.rsqrt %65 : vector<8x1xf32>
    %cst_34 = arith.constant 1.000000e-24 : f32
    %67 = vector.broadcast %cst_34 : f32 to vector<8x1xf32>
    %68 = arith.maximumf %63, %67 : vector<8x1xf32>
    %69 = math.rsqrt %68 : vector<8x1xf32>
    %70 = vector.shape_cast %66 : vector<8x1xf32> to vector<8x1xf32>
    %71 = vector.broadcast %70 : vector<8x1xf32> to vector<8x32xf32>
    %72 = vector.shape_cast %69 : vector<8x1xf32> to vector<8x1xf32>
    %73 = vector.broadcast %72 : vector<8x1xf32> to vector<8x32xf32>
    %74 = arith.select %54, %71, %73 : vector<8x32xi1>, vector<8x32xf32>
    %75 = arith.mulf %51, %74 : vector<8x32xf32>
    %c0_35 = arith.constant 0 : index
    %c0_36 = arith.constant 0 : index
    %76 = vector.load %arg10[%c0_35, %c0_36] : memref<8x32xf32, #tpu.memory_space<vmem>>, vector<8x32xf32>
    tpu.vector_store %arg10[%c0_35, %c0_36], %75 {strides = array<i32>} : memref<8x32xf32, #tpu.memory_space<vmem>>, vector<8x32xf32>,
    return
  }
}

</mosaic_0001>

<llo_original>
// kernel: tpu_custom_call.1
$region0: #{tpu_custom_call.1}
  #allocation0 [shape = 'u32[]', space=smem, size = 0x4, offset = 0x4, fixed_abs, tag = 'smem constant byte address 0x4 - core index']
  #allocation1 [shape = 'u32[144,128]{1,0:T(1,128)}', space=vmem, size = 0x12000, scoped, tag = 'internal scratch']
  %s0 = inlined_call_operand.vmem [shape: f32[8,1024], index: 0, kind: input, shape index: {}]
  %s1 = inlined_call_operand.vmem [shape: bf16[1024,32], index: 1, kind: input, shape index: {}]
  %s2 = inlined_call_operand.vmem [shape: f32[1,32], index: 2, kind: input, shape index: {}]
  %s3 = inlined_call_operand.vmem [shape: bf16[32,64], index: 3, kind: input, shape index: {}]
  %s4 = inlined_call_operand.vmem [shape: f32[1,64], index: 4, kind: input, shape index: {}]
  %s5 = inlined_call_operand.vmem [shape: f32[1,64], index: 5, kind: input, shape index: {}]
  %s6 = inlined_call_operand.vmem [shape: bf16[64,64], index: 6, kind: input, shape index: {}]
  %s7 = inlined_call_operand.vmem [shape: f32[1,64], index: 7, kind: input, shape index: {}]
  %s8 = inlined_call_operand.vmem [shape: bf16[64,32], index: 8, kind: input, shape index: {}]
  %s9 = inlined_call_operand.vmem [shape: f32[1,32], index: 9, kind: input, shape index: {}]
  %s10 = inlined_call_operand.hbm [shape: f32[8,32], index: 10, kind: output, shape index: {}]
  %s11 = sld [smem:[#allocation0]]
  $region50: #{tpu_custom_call.1} parent=0
    _
  %s13 = ssub.s32 1, %s11
  %s14 = scalar_select 0, %s13, %s11
  $region1: #{tpu_custom_call.1} parent=0
    #allocation2 [shape = 'u8[4096]{0}', space=vmem, size = 0x1000, scoped, tag = 'output window, operand 0, single buffered']
    #allocation3 [shape = 's32[1]{0}', space=sflag, size = 0x4, scoped, tag = 'scoped memory for tpu_custom_call.1']
    %15 = vsyncpa [#allocation3], 0
    // Predicated region
    $region2: #{tpu_custom_call.1} parent=1 // pred_check
      _
    $region3: #{tpu_custom_call.1} parent=1 // pred_check_branch
      %17 = sbr.rel (0) target = $region5
    $region4: #{tpu_custom_call.1} parent=1 // pred_region
      _
    $region5: #{tpu_custom_call.1} parent=1 // pred_fallthru
      _
    // Predicated region
    $region6: #{tpu_custom_call.1} parent=1 // pred_check
      _
    $region7: #{tpu_custom_call.1} parent=1 // pred_check_branch
      %19 = sbr.rel (0) target = $region9
    $region8: #{tpu_custom_call.1} parent=1 // pred_region
      _
    $region9: #{tpu_custom_call.1} parent=1 // pred_fallthru
      _
    // Predicated region
    $region10: #{tpu_custom_call.1} parent=1 // pred_check
      _
    $region11: #{tpu_custom_call.1} parent=1 // pred_check_branch
      %21 = sbr.rel (0) target = $region13
    $region12: #{tpu_custom_call.1} parent=1 // pred_region
      _
    $region13: #{tpu_custom_call.1} parent=1 // pred_fallthru
      _
    // Predicated region
    $region14: #{tpu_custom_call.1} parent=1 // pred_check
      _
    $region15: #{tpu_custom_call.1} parent=1 // pred_check_branch
      %23 = sbr.rel (0) target = $region17
    $region16: #{tpu_custom_call.1} parent=1 // pred_region
      _
    $region17: #{tpu_custom_call.1} parent=1 // pred_fallthru
      _
    // Predicated region
    $region18: #{tpu_custom_call.1} parent=1 // pred_check
      _
    $region19: #{tpu_custom_call.1} parent=1 // pred_check_branch
      %25 = sbr.rel (0) target = $region21
    $region20: #{tpu_custom_call.1} parent=1 // pred_region
      _
    $region21: #{tpu_custom_call.1} parent=1 // pred_fallthru
      _
    // Predicated region
    $region22: #{tpu_custom_call.1} parent=1 // pred_check
      _
    $region23: #{tpu_custom_call.1} parent=1 // pred_check_branch
      %27 = sbr.rel (0) target = $region25
    $region24: #{tpu_custom_call.1} parent=1 // pred_region
      _
    $region25: #{tpu_custom_call.1} parent=1 // pred_fallthru
      _
    // Predicated region
    $region26: #{tpu_custom_call.1} parent=1 // pred_check
      _
    $region27: #{tpu_custom_call.1} parent=1 // pred_check_branch
      %29 = sbr.rel (0) target = $region29
    $region28: #{tpu_custom_call.1} parent=1 // pred_region
      _
    $region29: #{tpu_custom_call.1} parent=1 // pred_fallthru
      _
    // Predicated region
    $region30: #{tpu_custom_call.1} parent=1 // pred_check
      _
    $region31: #{tpu_custom_call.1} parent=1 // pred_check_branch
      %31 = sbr.rel (0) target = $region33
    $region32: #{tpu_custom_call.1} parent=1 // pred_region
      _
    $region33: #{tpu_custom_call.1} parent=1 // pred_fallthru
      _
    // Predicated region
    $region34: #{tpu_custom_call.1} parent=1 // pred_check
      _
    $region35: #{tpu_custom_call.1} parent=1 // pred_check_branch
      %33 = sbr.rel (0) target = $region37
    $region36: #{tpu_custom_call.1} parent=1 // pred_region
      _
    $region37: #{tpu_custom_call.1} parent=1 // pred_fallthru
      _
    // Predicated region
    $region38: #{tpu_custom_call.1} parent=1 // pred_check
      _
    $region39: #{tpu_custom_call.1} parent=1 // pred_check_branch
      %35 = sbr.rel (0) target = $region41
    $region40: #{tpu_custom_call.1} parent=1 // pred_region
      _
    $region41: #{tpu_custom_call.1} parent=1 // pred_fallthru
      _
    %v37 = vld [vmem:[%s0] sm:$0xff]
    %v38 = vld [vmem:[%s0 + $0x8] sm:$0xff]
    %v39 = vld [vmem:[%s0 + $0x10] sm:$0xff]
    %v40 = vld [vmem:[%s0 + $0x18] sm:$0xff]
    %v41 = vld [vmem:[%s0 + $0x20] sm:$0xff]
    %v42 = vld [vmem:[%s0 + $0x28] sm:$0xff]
    %v43 = vld [vmem:[%s0 + $0x30] sm:$0xff]
    %v44 = vld [vmem:[%s0 + $0x38] sm:$0xff]
    %v45 = vpack.c.bf16 %v37, %v37
    %v46 = vpack.c.bf16 %v38, %v38
    %v47 = vpack.c.bf16 %v39, %v39
    %v48 = vpack.c.bf16 %v40, %v40
    %v49 = vpack.c.bf16 %v41, %v41
    %v50 = vpack.c.bf16 %v42, %v42
    %v51 = vpack.c.bf16 %v43, %v43
    %v52 = vpack.c.bf16 %v44, %v44
    %v53 = vld [vmem:[%s1] sm:$0xf]
    %v54 = vld [vmem:[%s1 + $0x4] sm:$0xf]
    %v55 = vld [vmem:[%s1 + $0x8] sm:$0xf]
    %v56 = vld [vmem:[%s1 + $0xc] sm:$0xf]
    %v57 = vld [vmem:[%s1 + $0x10] sm:$0xf]
    %v58 = vld [vmem:[%s1 + $0x14] sm:$0xf]
    %v59 = vld [vmem:[%s1 + $0x18] sm:$0xf]
    %v60 = vld [vmem:[%s1 + $0x1c] sm:$0xf]
    %v61 = vld [vmem:[%s1 + $0x20] sm:$0xf]
    %v62 = vld [vmem:[%s1 + $0x24] sm:$0xf]
    %v63 = vld [vmem:[%s1 + $0x28] sm:$0xf]
    %v64 = vld [vmem:[%s1 + $0x2c] sm:$0xf]
    %v65 = vld [vmem:[%s1 + $0x30] sm:$0xf]
    %v66 = vld [vmem:[%s1 + $0x34] sm:$0xf]
    %v67 = vld [vmem:[%s1 + $0x38] sm:$0xf]
    %v68 = vld [vmem:[%s1 + $0x3c] sm:$0xf]
    %v69 = vld [vmem:[%s1 + $0x40] sm:$0xf]
    %v70 = vld [vmem:[%s1 + $0x44] sm:$0xf]
    %v71 = vld [vmem:[%s1 + $0x48] sm:$0xf]
    %v72 = vld [vmem:[%s1 + $0x4c] sm:$0xf]
    %v73 = vld [vmem:[%s1 + $0x50] sm:$0xf]
    %v74 = vld [vmem:[%s1 + $0x54] sm:$0xf]
    %v75 = vld [vmem:[%s1 + $0x58] sm:$0xf]
    %v76 = vld [vmem:[%s1 + $0x5c] sm:$0xf]
    %v77 = vld [vmem:[%s1 + $0x60] sm:$0xf]
    %v78 = vld [vmem:[%s1 + $0x64] sm:$0xf]
    %v79 = vld [vmem:[%s1 + $0x68] sm:$0xf]
    %v80 = vld [vmem:[%s1 + $0x6c] sm:$0xf]
    %v81 = vld [vmem:[%s1 + $0x70] sm:$0xf]
    %v82 = vld [vmem:[%s1 + $0x74] sm:$0xf]
    %v83 = vld [vmem:[%s1 + $0x78] sm:$0xf]
    %v84 = vld [vmem:[%s1 + $0x7c] sm:$0xf]
    %v85 = vld [vmem:[%s1 + $0x80] sm:$0xf]
    %v86 = vld [vmem:[%s1 + $0x84] sm:$0xf]
    %v87 = vld [vmem:[%s1 + $0x88] sm:$0xf]
    %v88 = vld [vmem:[%s1 + $0x8c] sm:$0xf]
    %v89 = vld [vmem:[%s1 + $0x90] sm:$0xf]
    %v90 = vld [vmem:[%s1 + $0x94] sm:$0xf]
    %v91 = vld [vmem:[%s1 + $0x98] sm:$0xf]
    %v92 = vld [vmem:[%s1 + $0x9c] sm:$0xf]
    %v93 = vld [vmem:[%s1 + $0xa0] sm:$0xf]
    %v94 = vld [vmem:[%s1 + $0xa4] sm:$0xf]
    %v95 = vld [vmem:[%s1 + $0xa8] sm:$0xf]
    %v96 = vld [vmem:[%s1 + $0xac] sm:$0xf]
    %v97 = vld [vmem:[%s1 + $0xb0] sm:$0xf]
    %v98 = vld [vmem:[%s1 + $0xb4] sm:$0xf]
    %v99 = vld [vmem:[%s1 + $0xb8] sm:$0xf]
    %v100 = vld [vmem:[%s1 + $0xbc] sm:$0xf]
    %v101 = vld [vmem:[%s1 + $0xc0] sm:$0xf]
    %v102 = vld [vmem:[%s1 + $0xc4] sm:$0xf]
    %v103 = vld [vmem:[%s1 + $0xc8] sm:$0xf]
    %v104 = vld [vmem:[%s1 + $0xcc] sm:$0xf]
    %v105 = vld [vmem:[%s1 + $0xd0] sm:$0xf]
    %v106 = vld [vmem:[%s1 + $0xd4] sm:$0xf]
    %v107 = vld [vmem:[%s1 + $0xd8] sm:$0xf]
    %v108 = vld [vmem:[%s1 + $0xdc] sm:$0xf]
    %v109 = vld [vmem:[%s1 + $0xe0] sm:$0xf]
    %v110 = vld [vmem:[%s1 + $0xe4] sm:$0xf]
    %v111 = vld [vmem:[%s1 + $0xe8] sm:$0xf]
    %v112 = vld [vmem:[%s1 + $0xec] sm:$0xf]
    %v113 = vld [vmem:[%s1 + $0xf0] sm:$0xf]
    %v114 = vld [vmem:[%s1 + $0xf4] sm:$0xf]
    %v115 = vld [vmem:[%s1 + $0xf8] sm:$0xf]
    %v116 = vld [vmem:[%s1 + $0xfc] sm:$0xf]
    %v117 = vld [vmem:[%s1 + $0x100] sm:$0xf]
    %v118 = vld [vmem:[%s1 + $0x104] sm:$0xf]
    %v119 = vld [vmem:[%s1 + $0x108] sm:$0xf]
    %v120 = vld [vmem:[%s1 + $0x10c] sm:$0xf]
    %v121 = vld [vmem:[%s1 + $0x110] sm:$0xf]
    %v122 = vld [vmem:[%s1 + $0x114] sm:$0xf]
    %v123 = vld [vmem:[%s1 + $0x118] sm:$0xf]
    %v124 = vld [vmem:[%s1 + $0x11c] sm:$0xf]
    %v125 = vld [vmem:[%s1 + $0x120] sm:$0xf]
    %v126 = vld [vmem:[%s1 + $0x124] sm:$0xf]
    %v127 = vld [vmem:[%s1 + $0x128] sm:$0xf]
    %v128 = vld [vmem:[%s1 + $0x12c] sm:$0xf]
    %v129 = vld [vmem:[%s1 + $0x130] sm:$0xf]
    %v130 = vld [vmem:[%s1 + $0x134] sm:$0xf]
    %v131 = vld [vmem:[%s1 + $0x138] sm:$0xf]
    %v132 = vld [vmem:[%s1 + $0x13c] sm:$0xf]
    %v133 = vld [vmem:[%s1 + $0x140] sm:$0xf]
    %v134 = vld [vmem:[%s1 + $0x144] sm:$0xf]
    %v135 = vld [vmem:[%s1 + $0x148] sm:$0xf]
    %v136 = vld [vmem:[%s1 + $0x14c] sm:$0xf]
    %v137 = vld [vmem:[%s1 + $0x150] sm:$0xf]
    %v138 = vld [vmem:[%s1 + $0x154] sm:$0xf]
    %v139 = vld [vmem:[%s1 + $0x158] sm:$0xf]
    %v140 = vld [vmem:[%s1 + $0x15c] sm:$0xf]
    %v141 = vld [vmem:[%s1 + $0x160] sm:$0xf]
    %v142 = vld [vmem:[%s1 + $0x164] sm:$0xf]
    %v143 = vld [vmem:[%s1 + $0x168] sm:$0xf]
    %v144 = vld [vmem:[%s1 + $0x16c] sm:$0xf]
    %v145 = vld [vmem:[%s1 + $0x170] sm:$0xf]
    %v146 = vld [vmem:[%s1 + $0x174] sm:$0xf]
    %v147 = vld [vmem:[%s1 + $0x178] sm:$0xf]
    %v148 = vld [vmem:[%s1 + $0x17c] sm:$0xf]
    %v149 = vld [vmem:[%s1 + $0x180] sm:$0xf]
    %v150 = vld [vmem:[%s1 + $0x184] sm:$0xf]
    %v151 = vld [vmem:[%s1 + $0x188] sm:$0xf]
    %v152 = vld [vmem:[%s1 + $0x18c] sm:$0xf]
    %v153 = vld [vmem:[%s1 + $0x190] sm:$0xf]
    %v154 = vld [vmem:[%s1 + $0x194] sm:$0xf]
    %v155 = vld [vmem:[%s1 + $0x198] sm:$0xf]
    %v156 = vld [vmem:[%s1 + $0x19c] sm:$0xf]
    %v157 = vld [vmem:[%s1 + $0x1a0] sm:$0xf]
    %v158 = vld [vmem:[%s1 + $0x1a4] sm:$0xf]
    %v159 = vld [vmem:[%s1 + $0x1a8] sm:$0xf]
    %v160 = vld [vmem:[%s1 + $0x1ac] sm:$0xf]
    %v161 = vld [vmem:[%s1 + $0x1b0] sm:$0xf]
    %v162 = vld [vmem:[%s1 + $0x1b4] sm:$0xf]
    %v163 = vld [vmem:[%s1 + $0x1b8] sm:$0xf]
    %v164 = vld [vmem:[%s1 + $0x1bc] sm:$0xf]
    %v165 = vld [vmem:[%s1 + $0x1c0] sm:$0xf]
    %v166 = vld [vmem:[%s1 + $0x1c4] sm:$0xf]
    %v167 = vld [vmem:[%s1 + $0x1c8] sm:$0xf]
    %v168 = vld [vmem:[%s1 + $0x1cc] sm:$0xf]
    %v169 = vld [vmem:[%s1 + $0x1d0] sm:$0xf]
    %v170 = vld [vmem:[%s1 + $0x1d4] sm:$0xf]
    %v171 = vld [vmem:[%s1 + $0x1d8] sm:$0xf]
    %v172 = vld [vmem:[%s1 + $0x1dc] sm:$0xf]
    %v173 = vld [vmem:[%s1 + $0x1e0] sm:$0xf]
    %v174 = vld [vmem:[%s1 + $0x1e4] sm:$0xf]
    %v175 = vld [vmem:[%s1 + $0x1e8] sm:$0xf]
    %v176 = vld [vmem:[%s1 + $0x1ec] sm:$0xf]
    %v177 = vld [vmem:[%s1 + $0x1f0] sm:$0xf]
    %v178 = vld [vmem:[%s1 + $0x1f4] sm:$0xf]
    %v179 = vld [vmem:[%s1 + $0x1f8] sm:$0xf]
    %v180 = vld [vmem:[%s1 + $0x1fc] sm:$0xf]
    %v181 = vld [vmem:[%s2] sm:$0x1]
    %v183 = vlaneseq
    %v184 = vshrl.u32 %v183, 7
    %v185 = vsub.s32 0, %v184
    %v186 = vrot.slane %v181, %v185
    %v316 = vunpack.c.l.b16 %v53
    %v317 = vunpack.c.l.b16 %v54
    %v318 = vunpack.c.l.b16 %v55
    %v319 = vunpack.c.l.b16 %v56
    %v320 = vunpack.c.l.b16 %v57
    %v321 = vunpack.c.l.b16 %v58
    %v322 = vunpack.c.l.b16 %v59
    %v323 = vunpack.c.l.b16 %v60
    %v324 = vunpack.c.l.b16 %v61
    %v325 = vunpack.c.l.b16 %v62
    %v326 = vunpack.c.l.b16 %v63
    %v327 = vunpack.c.l.b16 %v64
    %v328 = vunpack.c.l.b16 %v65
    %v329 = vunpack.c.l.b16 %v66
    %v330 = vunpack.c.l.b16 %v67
    %v331 = vunpack.c.l.b16 %v68
    %v332 = vunpack.c.l.b16 %v69
    %v333 = vunpack.c.l.b16 %v70
    %v334 = vunpack.c.l.b16 %v71
    %v335 = vunpack.c.l.b16 %v72
    %v336 = vunpack.c.l.b16 %v73
    %v337 = vunpack.c.l.b16 %v74
    %v338 = vunpack.c.l.b16 %v75
    %v339 = vunpack.c.l.b16 %v76
    %v340 = vunpack.c.l.b16 %v77
    %v341 = vunpack.c.l.b16 %v78
    %v342 = vunpack.c.l.b16 %v79
    %v343 = vunpack.c.l.b16 %v80
    %v344 = vunpack.c.l.b16 %v81
    %v345 = vunpack.c.l.b16 %v82
    %v346 = vunpack.c.l.b16 %v83
    %v347 = vunpack.c.l.b16 %v84
    %v348 = vunpack.c.l.b16 %v85
    %v349 = vunpack.c.l.b16 %v86
    %v350 = vunpack.c.l.b16 %v87
    %v351 = vunpack.c.l.b16 %v88
    %v352 = vunpack.c.l.b16 %v89
    %v353 = vunpack.c.l.b16 %v90
    %v354 = vunpack.c.l.b16 %v91
    %v355 = vunpack.c.l.b16 %v92
    %v356 = vunpack.c.l.b16 %v93
    %v357 = vunpack.c.l.b16 %v94
    %v358 = vunpack.c.l.b16 %v95
    %v359 = vunpack.c.l.b16 %v96
    %v360 = vunpack.c.l.b16 %v97
    %v361 = vunpack.c.l.b16 %v98
    %v362 = vunpack.c.l.b16 %v99
    %v363 = vunpack.c.l.b16 %v100
    %v364 = vunpack.c.l.b16 %v101
    %v365 = vunpack.c.l.b16 %v102
    %v366 = vunpack.c.l.b16 %v103
    %v367 = vunpack.c.l.b16 %v104
    %v368 = vunpack.c.l.b16 %v105
    %v369 = vunpack.c.l.b16 %v106
    %v370 = vunpack.c.l.b16 %v107
    %v371 = vunpack.c.l.b16 %v108
    %v372 = vunpack.c.l.b16 %v109
    %v373 = vunpack.c.l.b16 %v110
    %v374 = vunpack.c.l.b16 %v111
    %v375 = vunpack.c.l.b16 %v112
    %v376 = vunpack.c.l.b16 %v113
    %v377 = vunpack.c.l.b16 %v114
    %v378 = vunpack.c.l.b16 %v115
    %v379 = vunpack.c.l.b16 %v116
    %v380 = vunpack.c.l.b16 %v117
    %v381 = vunpack.c.l.b16 %v118
    %v382 = vunpack.c.l.b16 %v119
    %v383 = vunpack.c.l.b16 %v120
    %v384 = vunpack.c.l.b16 %v121
    %v385 = vunpack.c.l.b16 %v122
    %v386 = vunpack.c.l.b16 %v123
    %v387 = vunpack.c.l.b16 %v124
    %v388 = vunpack.c.l.b16 %v125
    %v389 = vunpack.c.l.b16 %v126
    %v390 = vunpack.c.l.b16 %v127
    %v391 = vunpack.c.l.b16 %v128
    %v392 = vunpack.c.l.b16 %v129
    %v393 = vunpack.c.l.b16 %v130
    %v394 = vunpack.c.l.b16 %v131
    %v395 = vunpack.c.l.b16 %v132
    %v396 = vunpack.c.l.b16 %v133
    %v397 = vunpack.c.l.b16 %v134
    %v398 = vunpack.c.l.b16 %v135
    %v399 = vunpack.c.l.b16 %v136
    %v400 = vunpack.c.l.b16 %v137
    %v401 = vunpack.c.l.b16 %v138
    %v402 = vunpack.c.l.b16 %v139
    %v403 = vunpack.c.l.b16 %v140
    %v404 = vunpack.c.l.b16 %v141
    %v405 = vunpack.c.l.b16 %v142
    %v406 = vunpack.c.l.b16 %v143
    %v407 = vunpack.c.l.b16 %v144
    %v408 = vunpack.c.l.b16 %v145
    %v409 = vunpack.c.l.b16 %v146
    %v410 = vunpack.c.l.b16 %v147
    %v411 = vunpack.c.l.b16 %v148
    %v412 = vunpack.c.l.b16 %v149
    %v413 = vunpack.c.l.b16 %v150
    %v414 = vunpack.c.l.b16 %v151
    %v415 = vunpack.c.l.b16 %v152
    %v416 = vunpack.c.l.b16 %v153
    %v417 = vunpack.c.l.b16 %v154
    %v418 = vunpack.c.l.b16 %v155
    %v419 = vunpack.c.l.b16 %v156
    %v420 = vunpack.c.l.b16 %v157
    %v421 = vunpack.c.l.b16 %v158
    %v422 = vunpack.c.l.b16 %v159
    %v423 = vunpack.c.l.b16 %v160
    %v424 = vunpack.c.l.b16 %v161
    %v425 = vunpack.c.l.b16 %v162
    %v426 = vunpack.c.l.b16 %v163
    %v427 = vunpack.c.l.b16 %v164
    %v428 = vunpack.c.l.b16 %v165
    %v429 = vunpack.c.l.b16 %v166
    %v430 = vunpack.c.l.b16 %v167
    %v431 = vunpack.c.l.b16 %v168
    %v432 = vunpack.c.l.b16 %v169
    %v433 = vunpack.c.l.b16 %v170
    %v434 = vunpack.c.l.b16 %v171
    %v435 = vunpack.c.l.b16 %v172
    %v436 = vunpack.c.l.b16 %v173
    %v437 = vunpack.c.l.b16 %v174
    %v438 = vunpack.c.l.b16 %v175
    %v439 = vunpack.c.l.b16 %v176
    %v440 = vunpack.c.l.b16 %v177
    %v441 = vunpack.c.l.b16 %v178
    %v442 = vunpack.c.l.b16 %v179
    %v443 = vunpack.c.l.b16 %v180
    %v444 = vpack.c.b16 %v317, %v316
    %v445 = vpack.c.b16 %v319, %v318
    %v446 = vpack.c.b16 %v321, %v320
    %v447 = vpack.c.b16 %v323, %v322
    %v448 = vpack.c.b16 %v325, %v324
    %v449 = vpack.c.b16 %v327, %v326
    %v450 = vpack.c.b16 %v329, %v328
    %v451 = vpack.c.b16 %v331, %v330
    %v452 = vpack.c.b16 %v333, %v332
    %v453 = vpack.c.b16 %v335, %v334
    %v454 = vpack.c.b16 %v337, %v336
    %v455 = vpack.c.b16 %v339, %v338
    %v456 = vpack.c.b16 %v341, %v340
    %v457 = vpack.c.b16 %v343, %v342
    %v458 = vpack.c.b16 %v345, %v344
    %v459 = vpack.c.b16 %v347, %v346
    %v460 = vpack.c.b16 %v349, %v348
    %v461 = vpack.c.b16 %v351, %v350
    %v462 = vpack.c.b16 %v353, %v352
    %v463 = vpack.c.b16 %v355, %v354
    %v464 = vpack.c.b16 %v357, %v356
    %v465 = vpack.c.b16 %v359, %v358
    %v466 = vpack.c.b16 %v361, %v360
    %v467 = vpack.c.b16 %v363, %v362
    %v468 = vpack.c.b16 %v365, %v364
    %v469 = vpack.c.b16 %v367, %v366
    %v470 = vpack.c.b16 %v369, %v368
    %v471 = vpack.c.b16 %v371, %v370
    %v472 = vpack.c.b16 %v373, %v372
    %v473 = vpack.c.b16 %v375, %v374
    %v474 = vpack.c.b16 %v377, %v376
    %v475 = vpack.c.b16 %v379, %v378
    %v476 = vpack.c.b16 %v381, %v380
    %v477 = vpack.c.b16 %v383, %v382
    %v478 = vpack.c.b16 %v385, %v384
    %v479 = vpack.c.b16 %v387, %v386
    %v480 = vpack.c.b16 %v389, %v388
    %v481 = vpack.c.b16 %v391, %v390
    %v482 = vpack.c.b16 %v393, %v392
    %v483 = vpack.c.b16 %v395, %v394
    %v484 = vpack.c.b16 %v397, %v396
    %v485 = vpack.c.b16 %v399, %v398
    %v486 = vpack.c.b16 %v401, %v400
    %v487 = vpack.c.b16 %v403, %v402
    %v488 = vpack.c.b16 %v405, %v404
    %v489 = vpack.c.b16 %v407, %v406
    %v490 = vpack.c.b16 %v409, %v408
    %v491 = vpack.c.b16 %v411, %v410
    %v492 = vpack.c.b16 %v413, %v412
    %v493 = vpack.c.b16 %v415, %v414
    %v494 = vpack.c.b16 %v417, %v416
    %v495 = vpack.c.b16 %v419, %v418
    %v496 = vpack.c.b16 %v421, %v420
    %v497 = vpack.c.b16 %v423, %v422
    %v498 = vpack.c.b16 %v425, %v424
    %v499 = vpack.c.b16 %v427, %v426
    %v500 = vpack.c.b16 %v429, %v428
    %v501 = vpack.c.b16 %v431, %v430
    %v502 = vpack.c.b16 %v433, %v432
    %v503 = vpack.c.b16 %v435, %v434
    %v504 = vpack.c.b16 %v437, %v436
    %v505 = vpack.c.b16 %v439, %v438
    %v506 = vpack.c.b16 %v441, %v440
    %v507 = vpack.c.b16 %v443, %v442
    %572 = vmatprep.subr.bf16.mxu0 0
    %573 = vmatpush1.bf16.msra.mxu0 %v451
    %574 = vmatprep.subr.bf16.mxu0 0
    %575 = vmatpush1.bf16.msra.mxu0 %v450
    %576 = vmatprep.subr.bf16.mxu0 0
    %577 = vmatpush1.bf16.msra.mxu0 %v449
    %578 = vmatprep.subr.bf16.mxu0 0
    %579 = vmatpush1.bf16.msra.mxu0 %v448
    %580 = vmatprep.subr.bf16.mxu0 0
    %581 = vmatpush1.bf16.msra.mxu0 %v447
    %582 = vmatprep.subr.bf16.mxu0 0
    %583 = vmatpush1.bf16.msra.mxu0 %v446
    %584 = vmatprep.subr.bf16.mxu0 0
    %585 = vmatpush1.bf16.msra.mxu0 %v445
    %586 = vmatprep.subr.bf16.mxu0 0
    %587 = vmatpush1.bf16.msra.mxu0 %v444
    %588 = vmatprep.subr.bf16.mxu0 0
    %589 = vmatpush2.bf16.msra.mxu0 %v459
    %590 = vmatprep.subr.bf16.mxu0 0
    %591 = vmatpush2.bf16.msra.mxu0 %v458
    %592 = vmatprep.subr.bf16.mxu0 0
    %593 = vmatpush2.bf16.msra.mxu0 %v457
    %594 = vmatprep.subr.bf16.mxu0 0
    %595 = vmatpush2.bf16.msra.mxu0 %v456
    %596 = vmatprep.subr.bf16.mxu0 0
    %597 = vmatpush2.bf16.msra.mxu0 %v455
    %598 = vmatprep.subr.bf16.mxu0 0
    %599 = vmatpush2.bf16.msra.mxu0 %v454
    %600 = vmatprep.subr.bf16.mxu0 0
    %601 = vmatpush2.bf16.msra.mxu0 %v453
    %602 = vmatprep.subr.bf16.mxu0 0
    %603 = vmatpush2.bf16.msra.mxu0 %v452
    %604 = vmatprep.mubr.bf16.mxu0 %v46
    %605 = vmatmul.mubr.bf16.gmra.mxu0 %v45
    %v606 = vpop.f32.mrf.mxu0
    %v607 = vadd.f32 %v186, %v606
    %v608 = vpop.f32.mrf.mxu0
    %v609 = vpop.f32.mrf.mxu0
    %v610 = vpop.f32.mrf.mxu0
    %611 = vdwg.mxu0
    %612 = vmatprep.subr.bf16.mxu0 0
    %613 = vmatpush1.bf16.msra.mxu0 %v467
    %614 = vmatprep.subr.bf16.mxu0 0
    %615 = vmatpush1.bf16.msra.mxu0 %v466
    %616 = vmatprep.subr.bf16.mxu0 0
    %617 = vmatpush1.bf16.msra.mxu0 %v465
    %618 = vmatprep.subr.bf16.mxu0 0
    %619 = vmatpush1.bf16.msra.mxu0 %v464
    %620 = vmatprep.subr.bf16.mxu0 0
    %621 = vmatpush1.bf16.msra.mxu0 %v463
    %622 = vmatprep.subr.bf16.mxu0 0
    %623 = vmatpush1.bf16.msra.mxu0 %v462
    %624 = vmatprep.subr.bf16.mxu0 0
    %625 = vmatpush1.bf16.msra.mxu0 %v461
    %626 = vmatprep.subr.bf16.mxu0 0
    %627 = vmatpush1.bf16.msra.mxu0 %v460
    %628 = vmatprep.subr.bf16.mxu0 0
    %629 = vmatpush2.bf16.msra.mxu0 %v475
    %630 = vmatprep.subr.bf16.mxu0 0
    %631 = vmatpush2.bf16.msra.mxu0 %v474
    %632 = vmatprep.subr.bf16.mxu0 0
    %633 = vmatpush2.bf16.msra.mxu0 %v473
    %634 = vmatprep.subr.bf16.mxu0 0
    %635 = vmatpush2.bf16.msra.mxu0 %v472
    %636 = vmatprep.subr.bf16.mxu0 0
    %637 = vmatpush2.bf16.msra.mxu0 %v471
    %638 = vmatprep.subr.bf16.mxu0 0
    %639 = vmatpush2.bf16.msra.mxu0 %v470
    %640 = vmatprep.subr.bf16.mxu0 0
    %641 = vmatpush2.bf16.msra.mxu0 %v469
    %642 = vmatprep.subr.bf16.mxu0 0
    %643 = vmatpush2.bf16.msra.mxu0 %v468
    %644 = vmatprep.mubr.bf16.mxu0 %v48
    %645 = vmatmul.mubr.bf16.gmra.mxu0 %v47
    %v646 = vpop.f32.mrf.mxu0
    %v647 = vadd.f32 %v607, %v646
    %v648 = vpop.f32.mrf.mxu0
    %v649 = vpop.f32.mrf.mxu0
    %v650 = vpop.f32.mrf.mxu0
    %651 = vdwg.mxu0
    %652 = vmatprep.subr.bf16.mxu0 0
    %653 = vmatpush1.bf16.msra.mxu0 %v483
    %654 = vmatprep.subr.bf16.mxu0 0
    %655 = vmatpush1.bf16.msra.mxu0 %v482
    %656 = vmatprep.subr.bf16.mxu0 0
    %657 = vmatpush1.bf16.msra.mxu0 %v481
    %658 = vmatprep.subr.bf16.mxu0 0
    %659 = vmatpush1.bf16.msra.mxu0 %v480
    %660 = vmatprep.subr.bf16.mxu0 0
    %661 = vmatpush1.bf16.msra.mxu0 %v479
    %662 = vmatprep.subr.bf16.mxu0 0
    %663 = vmatpush1.bf16.msra.mxu0 %v478
    %664 = vmatprep.subr.bf16.mxu0 0
    %665 = vmatpush1.bf16.msra.mxu0 %v477
    %666 = vmatprep.subr.bf16.mxu0 0
    %667 = vmatpush1.bf16.msra.mxu0 %v476
    %668 = vmatprep.subr.bf16.mxu0 0
    %669 = vmatpush2.bf16.msra.mxu0 %v491
    %670 = vmatprep.subr.bf16.mxu0 0
    %671 = vmatpush2.bf16.msra.mxu0 %v490
    %672 = vmatprep.subr.bf16.mxu0 0
    %673 = vmatpush2.bf16.msra.mxu0 %v489
    %674 = vmatprep.subr.bf16.mxu0 0
    %675 = vmatpush2.bf16.msra.mxu0 %v488
    %676 = vmatprep.subr.bf16.mxu0 0
    %677 = vmatpush2.bf16.msra.mxu0 %v487
    %678 = vmatprep.subr.bf16.mxu0 0
    %679 = vmatpush2.bf16.msra.mxu0 %v486
    %680 = vmatprep.subr.bf16.mxu0 0
    %681 = vmatpush2.bf16.msra.mxu0 %v485
    %682 = vmatprep.subr.bf16.mxu0 0
    %683 = vmatpush2.bf16.msra.mxu0 %v484
    %684 = vmatprep.mubr.bf16.mxu0 %v50
    %685 = vmatmul.mubr.bf16.gmra.mxu0 %v49
    %v686 = vpop.f32.mrf.mxu0
    %v687 = vadd.f32 %v647, %v686
    %v688 = vpop.f32.mrf.mxu0
    %v689 = vpop.f32.mrf.mxu0
    %v690 = vpop.f32.mrf.mxu0
    %691 = vdwg.mxu0
    %692 = vmatprep.subr.bf16.mxu0 0
    %693 = vmatpush1.bf16.msra.mxu0 %v499
    %694 = vmatprep.subr.bf16.mxu0 0
    %695 = vmatpush1.bf16.msra.mxu0 %v498
    %696 = vmatprep.subr.bf16.mxu0 0
    %697 = vmatpush1.bf16.msra.mxu0 %v497
    %698 = vmatprep.subr.bf16.mxu0 0
    %699 = vmatpush1.bf16.msra.mxu0 %v496
    %700 = vmatprep.subr.bf16.mxu0 0
    %701 = vmatpush1.bf16.msra.mxu0 %v495
    %702 = vmatprep.subr.bf16.mxu0 0
    %703 = vmatpush1.bf16.msra.mxu0 %v494
    %704 = vmatprep.subr.bf16.mxu0 0
    %705 = vmatpush1.bf16.msra.mxu0 %v493
    %706 = vmatprep.subr.bf16.mxu0 0
    %707 = vmatpush1.bf16.msra.mxu0 %v492
    %708 = vmatprep.subr.bf16.mxu0 0
    %709 = vmatpush2.bf16.msra.mxu0 %v507
    %710 = vmatprep.subr.bf16.mxu0 0
    %711 = vmatpush2.bf16.msra.mxu0 %v506
    %712 = vmatprep.subr.bf16.mxu0 0
    %713 = vmatpush2.bf16.msra.mxu0 %v505
    %714 = vmatprep.subr.bf16.mxu0 0
    %715 = vmatpush2.bf16.msra.mxu0 %v504
    %716 = vmatprep.subr.bf16.mxu0 0
    %717 = vmatpush2.bf16.msra.mxu0 %v503
    %718 = vmatprep.subr.bf16.mxu0 0
    %719 = vmatpush2.bf16.msra.mxu0 %v502
    %720 = vmatprep.subr.bf16.mxu0 0
    %721 = vmatpush2.bf16.msra.mxu0 %v501
    %722 = vmatprep.subr.bf16.mxu0 0
    %723 = vmatpush2.bf16.msra.mxu0 %v500
    %724 = vmatprep.mubr.bf16.mxu0 %v52
    %725 = vmatmul.mubr.bf16.gmra.mxu0 %v51
    %v726 = vpop.f32.mrf.mxu0
    %v727 = vadd.f32 %v687, %v726
    %v728 = vpop.f32.mrf.mxu0
    %v729 = vpop.f32.mrf.mxu0
    %v730 = vpop.f32.mrf.mxu0
    %731 = vdwg.mxu0
    %v732 = vmax.f32 %v727, 0.0
    %v733 = vpack.c.bf16 %v732, %v732
    %v734 = vld [vmem:[%s3] sm:$0xf]
    %v735 = vld [vmem:[%s3 + $0x4] sm:$0xf]
    %v736 = vld [vmem:[%s3 + $0x8] sm:$0xf]
    %v737 = vld [vmem:[%s3 + $0xc] sm:$0xf]
    %v742 = vunpack.c.l.b16 %v734
    %v743 = vunpack.c.l.b16 %v735
    %v744 = vunpack.c.l.b16 %v736
    %v745 = vunpack.c.l.b16 %v737
    %v746 = vpack.c.b16 %v743, %v742
    %v747 = vpack.c.b16 %v745, %v744
    %vm750 = vcmask 261120
    %v752 = vsel %vm750, %v733, 0
    %754 = vmatprep.subr.bf16.mxu0 0
    %755 = vmatpush1.bf16.msra.mxu0 0
    %756 = vmatprep.subr.bf16.mxu0 0
    %757 = vmatpush1.bf16.msra.mxu0 0
    %758 = vmatprep.subr.bf16.mxu0 0
    %759 = vmatpush1.bf16.msra.mxu0 0
    %760 = vmatprep.subr.bf16.mxu0 0
    %761 = vmatpush1.bf16.msra.mxu0 0
    %762 = vmatprep.subr.bf16.mxu0 0
    %763 = vmatpush1.bf16.msra.mxu0 0
    %764 = vmatprep.subr.bf16.mxu0 0
    %765 = vmatpush1.bf16.msra.mxu0 0
    %766 = vmatprep.subr.bf16.mxu0 0
    %767 = vmatpush1.bf16.msra.mxu0 %v747
    %768 = vmatprep.subr.bf16.mxu0 0
    %769 = vmatpush1.bf16.msra.mxu0 %v746
    %770 = vmatprep.subr.bf16.mxu0 0
    %771 = vmatpush2.bf16.msra.mxu0 0
    %772 = vmatprep.subr.bf16.mxu0 0
    %773 = vmatpush2.bf16.msra.mxu0 0
    %774 = vmatprep.subr.bf16.mxu0 0
    %775 = vmatpush2.bf16.msra.mxu0 0
    %776 = vmatprep.subr.bf16.mxu0 0
    %777 = vmatpush2.bf16.msra.mxu0 0
    %778 = vmatprep.subr.bf16.mxu0 0
    %779 = vmatpush2.bf16.msra.mxu0 0
    %780 = vmatprep.subr.bf16.mxu0 0
    %781 = vmatpush2.bf16.msra.mxu0 0
    %782 = vmatprep.subr.bf16.mxu0 0
    %783 = vmatpush2.bf16.msra.mxu0 0
    %784 = vmatprep.subr.bf16.mxu0 0
    %785 = vmatpush2.bf16.msra.mxu0 0
    %786 = vmatprep.mubr.bf16.mxu0 0
    %787 = vmatmul.mubr.bf16.gmra.mxu0 %v752
    %v788 = vpop.f32.mrf.mxu0
    %v789 = vadd.f32 0.0, %v788
    %v790 = vpop.f32.mrf.mxu0
    %v791 = vpop.f32.mrf.mxu0
    %v792 = vpop.f32.mrf.mxu0
    %793 = vdwg.mxu0
    %v794 = vmul.f32 %v789, %v789
    %796 = vrot.lane.b32.xlu0 %v794, 64
    %v797 = vpop.permute.xlu0 %796
    %vm799 = vcmask 523264
    %v800 = vsel %vm799, %v789, %v797
    %v801 = vrot.slane %v800, 4
    %v802 = vadd.f32 %v800, %v801
    %v803 = vrot.slane %v802, 2
    %v804 = vadd.f32 %v802, %v803
    %v805 = vrot.slane %v804, 1
    %v806 = vadd.f32 %v804, %v805
    %v807 = vrcp.pop 8.0
    %v808 = vmul.f32 %v806, %v807
    %v809 = vmul.f32 %v808, %v808
    %811 = vrot.lane.b32.xlu0 %v809, 64
    %v812 = vpop.permute.xlu0 %811
    %v814 = vsub.f32 %v808, %v812
    %v815 = vmax.f32 %v814, 0.0
    %v816 = vld [vmem:[%s4] sm:$0x1]
    %v817 = vadd.f32 %v815, 1e-05
    %v818 = vrsqrt.pop %v817
    %v821 = vunpack.c.l.s4 1966171168
    %v822 = vunpack.c.0.s8 %v821
    %v823 = vlaneseq
    %v824 = vshrl.u32 %v823, 7
    %v825 = vsub.s32 %v822, %v824
    %v826 = vrot.slane %v818, %v825
    %v828 = vunpack.c.l.s4 1966171168
    %v829 = vunpack.c.0.s8 %v828
    %v830 = vlaneseq
    %v831 = vshrl.u32 %v830, 7
    %v832 = vsub.s32 %v829, %v831
    %v833 = vrot.slane %v826, %v832
    %834 = vrot.lane.b32.xlu0 %v833, 64
    %v835 = vpop.permute.xlu0 %834
    %v837 = vmul.f32 %v816, %v835
    %v838 = vld [vmem:[%s5] sm:$0x1]
    %v839 = vmul.f32 %v808, %v837
    %v840 = vsub.f32 %v838, %v839
    %v842 = vlaneseq
    %v843 = vshrl.u32 %v842, 7
    %v844 = vsub.s32 0, %v843
    %v845 = vrot.slane %v837, %v844
    %v847 = vmul.f32 %v789, %v845
    %v849 = vlaneseq
    %v850 = vshrl.u32 %v849, 7
    %v851 = vsub.s32 0, %v850
    %v852 = vrot.slane %v840, %v851
    %v854 = vadd.f32 %v847, %v852
    %v855 = vmax.f32 %v854, 0.0
    %v856 = vpack.c.bf16 %v855, %v855
    %v857 = vld [vmem:[%s6] sm:$0xf]
    %v858 = vld [vmem:[%s6 + $0x4] sm:$0xf]
    %v859 = vld [vmem:[%s6 + $0x8] sm:$0xf]
    %v860 = vld [vmem:[%s6 + $0xc] sm:$0xf]
    %v861 = vld [vmem:[%s6 + $0x10] sm:$0xf]
    %v862 = vld [vmem:[%s6 + $0x14] sm:$0xf]
    %v863 = vld [vmem:[%s6 + $0x18] sm:$0xf]
    %v864 = vld [vmem:[%s6 + $0x1c] sm:$0xf]
    %v865 = vld [vmem:[%s7] sm:$0x1]
    %v867 = vlaneseq
    %v868 = vshrl.u32 %v867, 7
    %v869 = vsub.s32 0, %v868
    %v870 = vrot.slane %v865, %v869
    %v880 = vunpack.c.l.b16 %v857
    %v881 = vunpack.c.l.b16 %v858
    %v882 = vunpack.c.l.b16 %v859
    %v883 = vunpack.c.l.b16 %v860
    %v884 = vunpack.c.l.b16 %v861
    %v885 = vunpack.c.l.b16 %v862
    %v886 = vunpack.c.l.b16 %v863
    %v887 = vunpack.c.l.b16 %v864
    %v888 = vpack.c.b16 %v881, %v880
    %v889 = vpack.c.b16 %v883, %v882
    %v890 = vpack.c.b16 %v885, %v884
    %v891 = vpack.c.b16 %v887, %v886
    %v897 = vsel %vm799, %v856, 0
    %899 = vmatprep.subr.bf16.mxu0 0
    %900 = vmatpush1.bf16.msra.mxu0 0
    %901 = vmatprep.subr.bf16.mxu0 0
    %902 = vmatpush1.bf16.msra.mxu0 0
    %903 = vmatprep.subr.bf16.mxu0 0
    %904 = vmatpush1.bf16.msra.mxu0 0
    %905 = vmatprep.subr.bf16.mxu0 0
    %906 = vmatpush1.bf16.msra.mxu0 0
    %907 = vmatprep.subr.bf16.mxu0 0
    %908 = vmatpush1.bf16.msra.mxu0 %v891
    %909 = vmatprep.subr.bf16.mxu0 0
    %910 = vmatpush1.bf16.msra.mxu0 %v890
    %911 = vmatprep.subr.bf16.mxu0 0
    %912 = vmatpush1.bf16.msra.mxu0 %v889
    %913 = vmatprep.subr.bf16.mxu0 0
    %914 = vmatpush1.bf16.msra.mxu0 %v888
    %915 = vmatprep.subr.bf16.mxu0 0
    %916 = vmatpush2.bf16.msra.mxu0 0
    %917 = vmatprep.subr.bf16.mxu0 0
    %918 = vmatpush2.bf16.msra.mxu0 0
    %919 = vmatprep.subr.bf16.mxu0 0
    %920 = vmatpush2.bf16.msra.mxu0 0
    %921 = vmatprep.subr.bf16.mxu0 0
    %922 = vmatpush2.bf16.msra.mxu0 0
    %923 = vmatprep.subr.bf16.mxu0 0
    %924 = vmatpush2.bf16.msra.mxu0 0
    %925 = vmatprep.subr.bf16.mxu0 0
    %926 = vmatpush2.bf16.msra.mxu0 0
    %927 = vmatprep.subr.bf16.mxu0 0
    %928 = vmatpush2.bf16.msra.mxu0 0
    %929 = vmatprep.subr.bf16.mxu0 0
    %930 = vmatpush2.bf16.msra.mxu0 0
    %931 = vmatprep.mubr.bf16.mxu0 0
    %932 = vmatmul.mubr.bf16.gmra.mxu0 %v897
    %v933 = vpop.f32.mrf.mxu0
    %v934 = vadd.f32 %v870, %v933
    %v935 = vpop.f32.mrf.mxu0
    %v936 = vpop.f32.mrf.mxu0
    %v937 = vpop.f32.mrf.mxu0
    %938 = vdwg.mxu0
    %v939 = vmax.f32 %v934, 0.0
    %v940 = vpack.c.bf16 %v939, %v939
    %v941 = vld [vmem:[%s8] sm:$0xf]
    %v942 = vld [vmem:[%s8 + $0x4] sm:$0xf]
    %v943 = vld [vmem:[%s8 + $0x8] sm:$0xf]
    %v944 = vld [vmem:[%s8 + $0xc] sm:$0xf]
    %v945 = vld [vmem:[%s8 + $0x10] sm:$0xf]
    %v946 = vld [vmem:[%s8 + $0x14] sm:$0xf]
    %v947 = vld [vmem:[%s8 + $0x18] sm:$0xf]
    %v948 = vld [vmem:[%s8 + $0x1c] sm:$0xf]
    %v949 = vld [vmem:[%s9] sm:$0x1]
    %v951 = vlaneseq
    %v952 = vshrl.u32 %v951, 7
    %v953 = vsub.s32 0, %v952
    %v954 = vrot.slane %v949, %v953
    %v964 = vunpack.c.l.b16 %v941
    %v965 = vunpack.c.l.b16 %v942
    %v966 = vunpack.c.l.b16 %v943
    %v967 = vunpack.c.l.b16 %v944
    %v968 = vunpack.c.l.b16 %v945
    %v969 = vunpack.c.l.b16 %v946
    %v970 = vunpack.c.l.b16 %v947
    %v971 = vunpack.c.l.b16 %v948
    %v972 = vpack.c.b16 %v965, %v964
    %v973 = vpack.c.b16 %v967, %v966
    %v974 = vpack.c.b16 %v969, %v968
    %v975 = vpack.c.b16 %v971, %v970
    %v981 = vsel %vm799, %v940, 0
    %983 = vmatprep.subr.bf16.mxu0 0
    %984 = vmatpush1.bf16.msra.mxu0 0
    %985 = vmatprep.subr.bf16.mxu0 0
    %986 = vmatpush1.bf16.msra.mxu0 0
    %987 = vmatprep.subr.bf16.mxu0 0
    %988 = vmatpush1.bf16.msra.mxu0 0
    %989 = vmatprep.subr.bf16.mxu0 0
    %990 = vmatpush1.bf16.msra.mxu0 0
    %991 = vmatprep.subr.bf16.mxu0 0
    %992 = vmatpush1.bf16.msra.mxu0 %v975
    %993 = vmatprep.subr.bf16.mxu0 0
    %994 = vmatpush1.bf16.msra.mxu0 %v974
    %995 = vmatprep.subr.bf16.mxu0 0
    %996 = vmatpush1.bf16.msra.mxu0 %v973
    %997 = vmatprep.subr.bf16.mxu0 0
    %998 = vmatpush1.bf16.msra.mxu0 %v972
    %999 = vmatprep.subr.bf16.mxu0 0
    %1000 = vmatpush2.bf16.msra.mxu0 0
    %1001 = vmatprep.subr.bf16.mxu0 0
    %1002 = vmatpush2.bf16.msra.mxu0 0
    %1003 = vmatprep.subr.bf16.mxu0 0
    %1004 = vmatpush2.bf16.msra.mxu0 0
    %1005 = vmatprep.subr.bf16.mxu0 0
    %1006 = vmatpush2.bf16.msra.mxu0 0
    %1007 = vmatprep.subr.bf16.mxu0 0
    %1008 = vmatpush2.bf16.msra.mxu0 0
    %1009 = vmatprep.subr.bf16.mxu0 0
    %1010 = vmatpush2.bf16.msra.mxu0 0
    %1011 = vmatprep.subr.bf16.mxu0 0
    %1012 = vmatpush2.bf16.msra.mxu0 0
    %1013 = vmatprep.subr.bf16.mxu0 0
    %1014 = vmatpush2.bf16.msra.mxu0 0
    %1015 = vmatprep.mubr.bf16.mxu0 0
    %1016 = vmatmul.mubr.bf16.gmra.mxu0 %v981
    %v1017 = vpop.f32.mrf.mxu0
    %v1018 = vadd.f32 %v954, %v1017
    %v1019 = vpop.f32.mrf.mxu0
    %v1020 = vpop.f32.mrf.mxu0
    %v1021 = vpop.f32.mrf.mxu0
    %1022 = vdwg.mxu0
    %v1023 = vlaneseq
    %v1024 = vand.u32 %v1023, 127
    %vm1025 = vcmp.lt.s32.totalorder %v1024, 16
    %v1026 = vmul.f32 %v1018, %v1018
    %v1027 = vsel %vm1025, %v1026, 0.0
    %v1028 = vsel %vm750, %v1027, 0.0
    %1029 = vadd.xlane.f32.xlu0 %v1028
    %v1030 = vpop.xlane.xlu0 %1029
    %v1031 = vsel %vm1025, 0.0, %v1026
    %v1032 = vsel %vm750, %v1031, 0.0
    %1033 = vadd.xlane.f32.xlu0 %v1032
    %v1034 = vpop.xlane.xlu0 %1033
    %v1035 = vmax.f32 %v1030, 1e-24
    %v1036 = vrsqrt.pop %v1035
    %v1037 = vmax.f32 %v1034, 1e-24
    %v1038 = vrsqrt.pop %v1037
    %v1039 = vsel %vm1025, %v1036, %v1038
    %v1040 = vmul.f32 %v1018, %v1039
    %1041 = vst.msk [vmem:[#allocation2] sm:$0xff] %vm750, %v1040
    // Predicated region
    $region42: #{tpu_custom_call.1} parent=1 // pred_check
      _
    $region43: #{tpu_custom_call.1} parent=1 // pred_check_branch
      %1043 = sbr.rel (0) target = $region45
    $region44: #{tpu_custom_call.1} parent=1 // pred_region
      %s1045 = ssub.s32 128, 128
      %1046 = vsyncadd [#allocation3], %s1045
      %s1048 = sshll.u32 [#allocation2], 4
      %s1049 = int_to_ptr.vmem [resolvable:$true] %s1048
      %1051 = dma.vmem_to_hbm [thread:$0]  %s1049, 128, %s10, [#allocation3]
    $region45: #{tpu_custom_call.1} parent=1 // pred_fallthru
      _
    // Predicated region
    $region46: #{tpu_custom_call.1} parent=1 // pred_check
      _
    $region47: #{tpu_custom_call.1} parent=1 // pred_check_branch
      %1053 = sbr.rel (0) target = $region49
    $region48: #{tpu_custom_call.1} parent=1 // pred_region
      %1054 = dma.done [#allocation3], 128
    $region49: #{tpu_custom_call.1} parent=1 // pred_fallthru
      _
    %1055 = vsyncpa [#allocation3], 1

</llo_original>
